<compile_context>
chip_gen: v5e
topology: v5e:2x2
jax: 0.10.0
libtpu: 0.0.40
codegen_flags: <defaults>
</compile_context>

<pallas_src>
import functools

import jax
import jax.numpy as jnp
from jax.experimental import pallas as pl
from jax.experimental.pallas import tpu as pltpu


# ----------------------------- Pallas kernel -------------------------------


def _policy_kernel(belief_ref, latent_ref,
                   w1b_ref, w1l_ref, b1_ref,
                   w2_ref, b2_ref,
                   w3_ref, b3_ref,
                   wh_ref, bh_ref,
                   out_ref,
                   *, min_action: float, max_action: float, ap: int):
    # First layer with the input concat folded into a split-K matmul:
    #   [belief | latent] @ W1 == belief @ W1[:Bdim] + latent @ W1[Bdim:]
    h = (jnp.dot(belief_ref[...], w1b_ref[...], preferred_element_type=jnp.float32)
         + jnp.dot(latent_ref[...], w1l_ref[...], preferred_element_type=jnp.float32)
         + b1_ref[...])
    h = jnp.maximum(h, 0.0)

    h = jnp.dot(h, w2_ref[...], preferred_element_type=jnp.float32) + b2_ref[...]
    h = jnp.maximum(h, 0.0)

    feats = jnp.dot(h, w3_ref[...], preferred_element_type=jnp.float32) + b3_ref[...]

    # Both heads fused into one (Hp, 2*Ap) matmul; sigmoid, then the two
    # different affine epilogues on the static, lane-aligned halves.
    heads = jax.nn.sigmoid(
        jnp.dot(feats, wh_ref[...], preferred_element_type=jnp.float32) + bh_ref[...])

    out_ref[:, :ap] = min_action + (max_action - min_action) * heads[:, :ap]
    out_ref[:, ap:] = -3.0 + 4.0 * heads[:, ap:]


# ------------------------- one-time parameter prep ---------------------------


def _round_up(n, m):
    return ((n + m - 1) // m) * m


def _pad_to(a, shape):
    pads = [(0, s - d) for d, s in zip(a.shape, shape)]
    return jnp.pad(a, pads)


def prepare_params(params, belief_dim, latent_dim):
    """Pad / fuse weights ONCE (off the hot path).

    params: dict with w1,b1,w2,b2,w3,b3,wm,bm,ws,bs, weights stored (in, out).
    Returns (padded_param_dict, meta_dict).
    """
    hidden_dim = params["w1"].shape[1]
    action_dim = params["wm"].shape[1]

    Ibp = _round_up(belief_dim, 128)
    Ilp = _round_up(latent_dim, 128)
    Hp = _round_up(hidden_dim, 128)
    Ap = _round_up(action_dim, 128)

    w1 = params["w1"]  # (belief_dim + latent_dim, hidden_dim)
    w1b = _pad_to(w1[:belief_dim], (Ibp, Hp))
    w1l = _pad_to(w1[belief_dim:], (Ilp, Hp))

    # Fused head weight: [W_mean | W_logstd] -> (Hp, 2*Ap)
    wh = jnp.concatenate([_pad_to(params["wm"], (hidden_dim, Ap)),
                          _pad_to(params["ws"], (hidden_dim, Ap))], axis=1)
    wh = _pad_to(wh, (Hp, 2 * Ap))
    bh = jnp.concatenate([_pad_to(params["bm"][None, :], (1, Ap)),
                          _pad_to(params["bs"][None, :], (1, Ap))], axis=1)

    padded = dict(
        w1b=w1b, w1l=w1l,
        b1=_pad_to(params["b1"][None, :], (1, Hp)),
        w2=_pad_to(params["w2"], (Hp, Hp)),
        b2=_pad_to(params["b2"][None, :], (1, Hp)),
        w3=_pad_to(params["w3"], (Hp, Hp)),
        b3=_pad_to(params["b3"][None, :], (1, Hp)),
        wh=wh, bh=bh,
    )
    # Materialize the padded weights on device once.
    padded = jax.tree_util.tree_map(
        lambda a: jax.device_put(jnp.asarray(a, jnp.float32)), padded)

    meta = dict(belief_dim=belief_dim, latent_dim=latent_dim,
                hidden_dim=hidden_dim, action_dim=action_dim,
                Ibp=Ibp, Ilp=Ilp, Hp=Hp, Ap=Ap)
    return padded, meta


# ------------------------------ JAX wrapper ---------------------------------


def continuous_policy_forward(belief, latent, padded, meta,
                              min_action=0.0, max_action=1.0):
    """Pallas equivalent of ContinuousPolicyNetwork.forward.

    belief: (B, belief_dim), latent: (B, latent_dim) (also accepts 1-D / 3-D
    like the torch module).  Returns (scaled_mean, scaled_log_std), each
    (B, action_dim).
    """
    # Mirror the torch dim-munging.
    if belief.ndim == 3:
        belief = belief[0]
    if latent.ndim == 3:
        latent = latent[0]
    if belief.ndim == 1:
        belief = belief[None, :]
    if latent.ndim == 1:
        latent = latent[None, :]

    B = belief.shape[0]
    Ibp, Ilp, Hp, Ap = meta["Ibp"], meta["Ilp"], meta["Hp"], meta["Ap"]
    action_dim = meta["action_dim"]

    # Batch tile: whole batch when small; 128-row blocks (sharded across
    # TensorCores via the parallel grid axis) once B grows.
    BM = 128 if B >= 128 else _round_up(B, 8)
    Bp = _round_up(B, BM)

    belief_p = _pad_to(belief.astype(jnp.float32), (Bp, Ibp))
    latent_p = _pad_to(latent.astype(jnp.float32), (Bp, Ilp))

    kernel = functools.partial(_policy_kernel,
                               min_action=float(min_action),
                               max_action=float(max_action),
                               ap=Ap)

    def _wspec(shape):
        return pl.BlockSpec(shape, lambda i: (0, 0))

    # VMEM budget: whole-array-resident weights (+headroom for double buffers
    # of the batch-tiled activations).  Clamped so it stays valid on v7x
    # (64 MiB physical) as well as v5e/v6e.
    weight_bytes = 4 * (Ibp * Hp + Ilp * Hp + 2 * Hp * Hp + Hp * 2 * Ap
                        + 3 * Hp + 2 * Ap)
    io_bytes = 4 * 2 * (BM * Ibp + BM * Ilp + BM * 2 * Ap)
    vmem_limit = int(min(max(2 * weight_bytes + io_bytes + (8 << 20), 16 << 20),
                         64 << 20))

    out_p = pl.pallas_call(
        kernel,
        out_shape=jax.ShapeDtypeStruct((Bp, 2 * Ap), jnp.float32),
        grid=(Bp // BM,),
        in_specs=[
            pl.BlockSpec((BM, Ibp), lambda i: (i, 0)),
            pl.BlockSpec((BM, Ilp), lambda i: (i, 0)),
            _wspec(padded["w1b"].shape),
            _wspec(padded["w1l"].shape),
            _wspec(padded["b1"].shape),
            _wspec(padded["w2"].shape),
            _wspec(padded["b2"].shape),
            _wspec(padded["w3"].shape),
            _wspec(padded["b3"].shape),
            _wspec(padded["wh"].shape),
            _wspec(padded["bh"].shape),
        ],
        out_specs=pl.BlockSpec((BM, 2 * Ap), lambda i: (i, 0)),
        compiler_params=pltpu.CompilerParams(
            dimension_semantics=("parallel",),
            vmem_limit_bytes=vmem_limit),
    )(belief_p, latent_p,
      padded["w1b"], padded["w1l"], padded["b1"],
      padded["w2"], padded["b2"],
      padded["w3"], padded["b3"],
      padded["wh"], padded["bh"])

    mean = out_p[:B, :action_dim]
    log_std = out_p[:B, Ap:Ap + action_dim]
    return mean, log_std


# ------------------------- deterministic parameters --------------------------


def init_params(key, belief_dim, latent_dim, hidden_dim, action_dim):
    """Deterministic init matching the module's layer shapes.

    Weights stored as (in, out).  log_std_head bias is constant -2 as in the
    PyTorch __init__.
    """
    input_dim = belief_dim + latent_dim
    dims = [
        ("w1", "b1", input_dim, hidden_dim),
        ("w2", "b2", hidden_dim, hidden_dim),
        ("w3", "b3", hidden_dim, hidden_dim),
        ("wm", "bm", hidden_dim, action_dim),
        ("ws", "bs", hidden_dim, action_dim),
    ]
    params = {}
    keys = jax.random.split(key, 2 * len(dims))
    for i, (wn, bn, fin, fout) in enumerate(dims):
        bound = 1.0 / jnp.sqrt(fin)
        params[wn] = jax.random.uniform(keys[2 * i], (fin, fout),
                                        jnp.float32, -bound, bound)
        params[bn] = jax.random.uniform(keys[2 * i + 1], (fout,),
                                        jnp.float32, -bound, bound)
    params["bs"] = jnp.full((action_dim,), -2.0, jnp.float32)  # log_std bias
    return params


# ----------------------------------- main ------------------------------------


def _reference_forward(belief, latent, params, min_action, max_action):
    x = jnp.concatenate([belief, latent], axis=1).astype(jnp.float32)
    h = jnp.maximum(x @ params["w1"] + params["b1"], 0.0)
    h = jnp.maximum(h @ params["w2"] + params["b2"], 0.0)
    f = h @ params["w3"] + params["b3"]
    mean = jax.nn.sigmoid(f @ params["wm"] + params["bm"])
    log_std = jax.nn.sigmoid(f @ params["ws"] + params["bs"])
    return (min_action + (max_action - min_action) * mean,
            -3.0 + 4.0 * log_std)


if __name__ == "__main__":
    belief_dim, latent_dim, hidden_dim, action_dim = 16, 16, 32, 8
    batch = 2
    min_action, max_action = 0.0, 1.0

    key = jax.random.PRNGKey(0)
    k_params, k_belief, k_latent = jax.random.split(key, 3)

    params = init_params(k_params, belief_dim, latent_dim, hidden_dim, action_dim)
    belief = jax.random.normal(k_belief, (batch, belief_dim), jnp.float32)
    latent = jax.random.normal(k_latent, (batch, latent_dim), jnp.float32)

    # One-time (off hot path) weight padding / head fusion.
    padded, meta = prepare_params(params, belief_dim, latent_dim)

    mean, log_std = continuous_policy_forward(belief, latent, padded, meta,
                                              min_action, max_action)
    mean = jax.block_until_ready(mean)
    log_std = jax.block_until_ready(log_std)

    ref_mean, ref_log_std = _reference_forward(belief, latent, params,
                                               min_action, max_action)
    assert mean.shape == (batch, action_dim)
    assert log_std.shape == (batch, action_dim)
    assert jnp.allclose(mean, ref_mean, atol=1e-5, rtol=1e-5)
    assert jnp.allclose(log_std, ref_log_std, atol=1e-5, rtol=1e-5)

    print("KERNEL_OK")
</pallas_src>

<mosaic_0001>
module attributes {stable_mosaic.version = 11 : i64} {
  func.func @_policy_kernel(%arg0: i32, %arg1: memref<8x128xf32, #tpu.memory_space<vmem>>, %arg2: memref<8x128xf32, #tpu.memory_space<vmem>>, %arg3: memref<128x128xf32, #tpu.memory_space<vmem>>, %arg4: memref<128x128xf32, #tpu.memory_space<vmem>>, %arg5: memref<1x128xf32, #tpu.memory_space<vmem>>, %arg6: memref<128x128xf32, #tpu.memory_space<vmem>>, %arg7: memref<1x128xf32, #tpu.memory_space<vmem>>, %arg8: memref<128x128xf32, #tpu.memory_space<vmem>>, %arg9: memref<1x128xf32, #tpu.memory_space<vmem>>, %arg10: memref<128x256xf32, #tpu.memory_space<vmem>>, %arg11: memref<1x256xf32, #tpu.memory_space<vmem>>, %arg12: memref<8x256xf32, #tpu.memory_space<vmem>>) attributes {dimension_semantics = [#tpu.dimension_semantics<parallel>], iteration_bounds = array<i64: 1>, scalar_prefetch = 0 : i64, scratch_operands = 0 : i64, tpu.core_type = #tpu.core_type<tc>, window_params = [{transform_indices = @transform_0, window_bounds = array<i64: 8, 128>}, {transform_indices = @transform_1, window_bounds = array<i64: 8, 128>}, {pipeline_mode = #tpu.pipeline_mode<synchronous>, transform_indices = @transform_2, window_bounds = array<i64: 128, 128>}, {pipeline_mode = #tpu.pipeline_mode<synchronous>, transform_indices = @transform_3, window_bounds = array<i64: 128, 128>}, {pipeline_mode = #tpu.pipeline_mode<synchronous>, transform_indices = @transform_4, window_bounds = array<i64: 1, 128>}, {pipeline_mode = #tpu.pipeline_mode<synchronous>, transform_indices = @transform_5, window_bounds = array<i64: 128, 128>}, {pipeline_mode = #tpu.pipeline_mode<synchronous>, transform_indices = @transform_6, window_bounds = array<i64: 1, 128>}, {pipeline_mode = #tpu.pipeline_mode<synchronous>, transform_indices = @transform_7, window_bounds = array<i64: 128, 128>}, {pipeline_mode = #tpu.pipeline_mode<synchronous>, transform_indices = @transform_8, window_bounds = array<i64: 1, 128>}, {pipeline_mode = #tpu.pipeline_mode<synchronous>, transform_indices = @transform_9, window_bounds = array<i64: 128, 256>}, {pipeline_mode = #tpu.pipeline_mode<synchronous>, transform_indices = @transform_10, window_bounds = array<i64: 1, 256>}, {transform_indices = @transform_11, window_bounds = array<i64: 8, 256>}]} {
    %c0 = arith.constant 0 : index
    %c0_0 = arith.constant 0 : index
    %0 = vector.load %arg1[%c0, %c0_0] : memref<8x128xf32, #tpu.memory_space<vmem>>, vector<8x128xf32>
    %c0_1 = arith.constant 0 : index
    %c0_2 = arith.constant 0 : index
    %1 = vector.load %arg3[%c0_1, %c0_2] : memref<128x128xf32, #tpu.memory_space<vmem>>, vector<128x128xf32>
    %cst = arith.constant dense<0.000000e+00> : vector<8x128xf32>
    %2 = tpu.matmul %0, %1, %cst {dimension_numbers = #tpu.dot_dimension_numbers<[1], [0], [0], [1], [0, 0, 1, 1], [], []>} : vector<8x128xf32>, vector<128x128xf32>, vector<8x128xf32> -> vector<8x128xf32>
    %c0_3 = arith.constant 0 : index
    %c0_4 = arith.constant 0 : index
    %3 = vector.load %arg2[%c0_3, %c0_4] : memref<8x128xf32, #tpu.memory_space<vmem>>, vector<8x128xf32>
    %c0_5 = arith.constant 0 : index
    %c0_6 = arith.constant 0 : index
    %4 = vector.load %arg4[%c0_5, %c0_6] : memref<128x128xf32, #tpu.memory_space<vmem>>, vector<128x128xf32>
    %cst_7 = arith.constant dense<0.000000e+00> : vector<8x128xf32>
    %5 = tpu.matmul %3, %4, %cst_7 {dimension_numbers = #tpu.dot_dimension_numbers<[1], [0], [0], [1], [0, 0, 1, 1], [], []>} : vector<8x128xf32>, vector<128x128xf32>, vector<8x128xf32> -> vector<8x128xf32>
    %6 = arith.addf %2, %5 : vector<8x128xf32>
    %c0_8 = arith.constant 0 : index
    %c0_9 = arith.constant 0 : index
    %7 = vector.load %arg5[%c0_8, %c0_9] : memref<1x128xf32, #tpu.memory_space<vmem>>, vector<1x128xf32>
    %8 = vector.broadcast %7 : vector<1x128xf32> to vector<8x128xf32>
    %9 = arith.addf %6, %8 : vector<8x128xf32>
    %cst_10 = arith.constant 0.000000e+00 : f32
    %10 = vector.broadcast %cst_10 : f32 to vector<8x128xf32>
    %11 = arith.maximumf %9, %10 : vector<8x128xf32>
    %c0_11 = arith.constant 0 : index
    %c0_12 = arith.constant 0 : index
    %12 = vector.load %arg6[%c0_11, %c0_12] : memref<128x128xf32, #tpu.memory_space<vmem>>, vector<128x128xf32>
    %cst_13 = arith.constant dense<0.000000e+00> : vector<8x128xf32>
    %13 = tpu.matmul %11, %12, %cst_13 {dimension_numbers = #tpu.dot_dimension_numbers<[1], [0], [0], [1], [0, 0, 1, 1], [], []>} : vector<8x128xf32>, vector<128x128xf32>, vector<8x128xf32> -> vector<8x128xf32>
    %c0_14 = arith.constant 0 : index
    %c0_15 = arith.constant 0 : index
    %14 = vector.load %arg7[%c0_14, %c0_15] : memref<1x128xf32, #tpu.memory_space<vmem>>, vector<1x128xf32>
    %15 = vector.broadcast %14 : vector<1x128xf32> to vector<8x128xf32>
    %16 = arith.addf %13, %15 : vector<8x128xf32>
    %cst_16 = arith.constant 0.000000e+00 : f32
    %17 = vector.broadcast %cst_16 : f32 to vector<8x128xf32>
    %18 = arith.maximumf %16, %17 : vector<8x128xf32>
    %c0_17 = arith.constant 0 : index
    %c0_18 = arith.constant 0 : index
    %19 = vector.load %arg8[%c0_17, %c0_18] : memref<128x128xf32, #tpu.memory_space<vmem>>, vector<128x128xf32>
    %cst_19 = arith.constant dense<0.000000e+00> : vector<8x128xf32>
    %20 = tpu.matmul %18, %19, %cst_19 {dimension_numbers = #tpu.dot_dimension_numbers<[1], [0], [0], [1], [0, 0, 1, 1], [], []>} : vector<8x128xf32>, vector<128x128xf32>, vector<8x128xf32> -> vector<8x128xf32>
    %c0_20 = arith.constant 0 : index
    %c0_21 = arith.constant 0 : index
    %21 = vector.load %arg9[%c0_20, %c0_21] : memref<1x128xf32, #tpu.memory_space<vmem>>, vector<1x128xf32>
    %22 = vector.broadcast %21 : vector<1x128xf32> to vector<8x128xf32>
    %23 = arith.addf %20, %22 : vector<8x128xf32>
    %c0_22 = arith.constant 0 : index
    %c0_23 = arith.constant 0 : index
    %24 = vector.load %arg10[%c0_22, %c0_23] : memref<128x256xf32, #tpu.memory_space<vmem>>, vector<128x256xf32>
    %cst_24 = arith.constant dense<0.000000e+00> : vector<8x256xf32>
    %25 = tpu.matmul %23, %24, %cst_24 {dimension_numbers = #tpu.dot_dimension_numbers<[1], [0], [0], [1], [0, 0, 1, 1], [], []>} : vector<8x128xf32>, vector<128x256xf32>, vector<8x256xf32> -> vector<8x256xf32>
    %c0_25 = arith.constant 0 : index
    %c0_26 = arith.constant 0 : index
    %26 = vector.load %arg11[%c0_25, %c0_26] : memref<1x256xf32, #tpu.memory_space<vmem>>, vector<1x256xf32>
    %27 = vector.broadcast %26 : vector<1x256xf32> to vector<8x256xf32>
    %28 = arith.addf %25, %27 : vector<8x256xf32>
    %29 = arith.negf %28 : vector<8x256xf32>
    %30 = math.exp %29 : vector<8x256xf32>
    %cst_27 = arith.constant 1.000000e+00 : f32
    %31 = vector.broadcast %cst_27 : f32 to vector<8x256xf32>
    %32 = arith.addf %31, %30 : vector<8x256xf32>
    %33 = arith.divf %31, %32 : vector<8x256xf32>
    %34 = vector.extract_strided_slice %33 {offsets = [0, 0], sizes = [8, 128], strides = [1, 1]} : vector<8x256xf32> to vector<8x128xf32>
    %cst_28 = arith.constant 1.000000e+00 : f32
    %35 = vector.broadcast %cst_28 : f32 to vector<8x128xf32>
    %36 = arith.mulf %35, %34 : vector<8x128xf32>
    %cst_29 = arith.constant 0.000000e+00 : f32
    %37 = vector.broadcast %cst_29 : f32 to vector<8x128xf32>
    %38 = arith.addf %37, %36 : vector<8x128xf32>
    %c0_30 = arith.constant 0 : index
    %c0_31 = arith.constant 0 : index
    %39 = vector.load %arg12[%c0_30, %c0_31] : memref<8x256xf32, #tpu.memory_space<vmem>>, vector<8x128xf32>
    tpu.vector_store %arg12[%c0_30, %c0_31], %38 {strides = array<i32>} : memref<8x256xf32, #tpu.memory_space<vmem>>, vector<8x128xf32>,
    %40 = vector.extract_strided_slice %33 {offsets = [0, 128], sizes = [8, 128], strides = [1, 1]} : vector<8x256xf32> to vector<8x128xf32>
    %cst_32 = arith.constant 4.000000e+00 : f32
    %41 = vector.broadcast %cst_32 : f32 to vector<8x128xf32>
    %42 = arith.mulf %41, %40 : vector<8x128xf32>
    %cst_33 = arith.constant -3.000000e+00 : f32
    %43 = vector.broadcast %cst_33 : f32 to vector<8x128xf32>
    %44 = arith.addf %43, %42 : vector<8x128xf32>
    %c0_34 = arith.constant 0 : index
    %c128 = arith.constant 128 : index
    %45 = vector.load %arg12[%c0_34, %c128] : memref<8x256xf32, #tpu.memory_space<vmem>>, vector<8x128xf32>
    tpu.vector_store %arg12[%c0_34, %c128], %44 {strides = array<i32>} : memref<8x256xf32, #tpu.memory_space<vmem>>, vector<8x128xf32>,
    return
  }
  func.func @transform_0(%arg0: i32) -> (i32, i32) {
    %c0_i32 = arith.constant 0 : i32
    %c0_i32_0 = arith.constant 0 : i32
    return %arg0, %c0_i32 : i32, i32
  }
  func.func @transform_1(%arg0: i32) -> (i32, i32) {
    %c0_i32 = arith.constant 0 : i32
    %c0_i32_0 = arith.constant 0 : i32
    return %arg0, %c0_i32 : i32, i32
  }
  func.func @transform_2(%arg0: i32) -> (i32, i32) {
    %c0_i32 = arith.constant 0 : i32
    %c0_i32_0 = arith.constant 0 : i32
    %c0_i32_1 = arith.constant 0 : i32
    return %c0_i32, %c0_i32_0 : i32, i32
  }
  func.func @transform_3(%arg0: i32) -> (i32, i32) {
    %c0_i32 = arith.constant 0 : i32
    %c0_i32_0 = arith.constant 0 : i32
    %c0_i32_1 = arith.constant 0 : i32
    return %c0_i32, %c0_i32_0 : i32, i32
  }
  func.func @transform_4(%arg0: i32) -> (i32, i32) {
    %c0_i32 = arith.constant 0 : i32
    %c0_i32_0 = arith.constant 0 : i32
    %c0_i32_1 = arith.constant 0 : i32
    return %c0_i32, %c0_i32_0 : i32, i32
  }
  func.func @transform_5(%arg0: i32) -> (i32, i32) {
    %c0_i32 = arith.constant 0 : i32
    %c0_i32_0 = arith.constant 0 : i32
    %c0_i32_1 = arith.constant 0 : i32
    return %c0_i32, %c0_i32_0 : i32, i32
  }
  func.func @transform_6(%arg0: i32) -> (i32, i32) {
    %c0_i32 = arith.constant 0 : i32
    %c0_i32_0 = arith.constant 0 : i32
    %c0_i32_1 = arith.constant 0 : i32
    return %c0_i32, %c0_i32_0 : i32, i32
  }
  func.func @transform_7(%arg0: i32) -> (i32, i32) {
    %c0_i32 = arith.constant 0 : i32
    %c0_i32_0 = arith.constant 0 : i32
    %c0_i32_1 = arith.constant 0 : i32
    return %c0_i32, %c0_i32_0 : i32, i32
  }
  func.func @transform_8(%arg0: i32) -> (i32, i32) {
    %c0_i32 = arith.constant 0 : i32
    %c0_i32_0 = arith.constant 0 : i32
    %c0_i32_1 = arith.constant 0 : i32
    return %c0_i32, %c0_i32_0 : i32, i32
  }
  func.func @transform_9(%arg0: i32) -> (i32, i32) {
    %c0_i32 = arith.constant 0 : i32
    %c0_i32_0 = arith.constant 0 : i32
    %c0_i32_1 = arith.constant 0 : i32
    return %c0_i32, %c0_i32_0 : i32, i32
  }
  func.func @transform_10(%arg0: i32) -> (i32, i32) {
    %c0_i32 = arith.constant 0 : i32
    %c0_i32_0 = arith.constant 0 : i32
    %c0_i32_1 = arith.constant 0 : i32
    return %c0_i32, %c0_i32_0 : i32, i32
  }
  func.func @transform_11(%arg0: i32) -> (i32, i32) {
    %c0_i32 = arith.constant 0 : i32
    %c0_i32_0 = arith.constant 0 : i32
    return %arg0, %c0_i32 : i32, i32
  }
}

</mosaic_0001>

<llo_original>
// kernel: tpu_custom_call.1
$region0: #{tpu_custom_call.1}
  #allocation0 [shape = 'u32[]', space=smem, size = 0x4, offset = 0x4, fixed_abs, tag = 'smem constant byte address 0x4 - core index']
  #allocation1 [shape = 'u32[72,128]{1,0:T(1,128)}', space=vmem, size = 0x9000, scoped, tag = 'internal scratch']
  %s0 = inlined_call_operand.hbm [shape: f32[8,128], index: 0, kind: input, shape index: {}]
  %s1 = inlined_call_operand.hbm [shape: f32[8,128], index: 1, kind: input, shape index: {}]
  %s2 = inlined_call_operand.hbm [shape: f32[128,128], index: 2, kind: input, shape index: {}]
  %s3 = inlined_call_operand.hbm [shape: f32[128,128], index: 3, kind: input, shape index: {}]
  %s4 = inlined_call_operand.vmem [shape: f32[1,128], index: 4, kind: input, shape index: {}]
  %s5 = inlined_call_operand.hbm [shape: f32[128,128], index: 5, kind: input, shape index: {}]
  %s6 = inlined_call_operand.vmem [shape: f32[1,128], index: 6, kind: input, shape index: {}]
  %s7 = inlined_call_operand.hbm [shape: f32[128,128], index: 7, kind: input, shape index: {}]
  %s8 = inlined_call_operand.vmem [shape: f32[1,128], index: 8, kind: input, shape index: {}]
  %s9 = inlined_call_operand.hbm [shape: f32[128,256], index: 9, kind: input, shape index: {}]
  %s10 = inlined_call_operand.vmem [shape: f32[1,256], index: 10, kind: input, shape index: {}]
  %s11 = inlined_call_operand.hbm [shape: f32[8,256], index: 11, kind: output, shape index: {}]
  %s12 = sld [smem:[#allocation0]]
  $region82: #{tpu_custom_call.1} parent=0
    _
  %s14 = ssub.s32 1, %s12
  %s15 = scalar_select 0, %s14, %s12
  $region1: #{tpu_custom_call.1} parent=0
    #allocation2 [shape = 'u8[4096]{0}', space=vmem, size = 0x1000, scoped, tag = 'input window, operand 0, single buffered']
    #allocation3 [shape = 's32[1]{0}', space=sflag, size = 0x4, scoped, tag = 'scoped memory for tpu_custom_call.1']
    #allocation4 [shape = 's32[1]{0}', space=sflag, size = 0x4, scoped, tag = 'scoped memory for tpu_custom_call.1']
    #allocation5 [shape = 'u8[4096]{0}', space=vmem, size = 0x1000, scoped, tag = 'input window, operand 1, single buffered']
    #allocation6 [shape = 's32[1]{0}', space=sflag, size = 0x4, scoped, tag = 'scoped memory for tpu_custom_call.1']
    #allocation7 [shape = 'u8[65536]{0}', space=vmem, size = 0x10000, scoped, tag = 'input window, operand 2, single buffered']
    #allocation8 [shape = 'u8[65536]{0}', space=vmem, size = 0x10000, scoped, tag = 'input window, operand 3, single buffered']
    #allocation9 [shape = 's32[1]{0}', space=sflag, size = 0x4, scoped, tag = 'scoped memory for tpu_custom_call.1']
    #allocation10 [shape = 'u8[65536]{0}', space=vmem, size = 0x10000, scoped, tag = 'input window, operand 5, single buffered']
    #allocation11 [shape = 'u8[65536]{0}', space=vmem, size = 0x10000, scoped, tag = 'input window, operand 7, single buffered']
    #allocation12 [shape = 's32[1]{0}', space=sflag, size = 0x4, scoped, tag = 'scoped memory for tpu_custom_call.1']
    #allocation13 [shape = 'u8[131072]{0}', space=vmem, size = 0x20000, scoped, tag = 'input window, operand 9, single buffered']
    #allocation14 [shape = 'u8[8192]{0}', space=vmem, size = 0x2000, scoped, tag = 'output window, operand 0, single buffered']
    %16 = vsyncpa [#allocation3], 0
    %17 = vsyncpa [#allocation6], 0
    %18 = vsyncpa [#allocation9], 0
    %19 = vsyncpa [#allocation12], 0
    %20 = vsyncpa [#allocation4], 0
    // Predicated region
    $region2: #{tpu_custom_call.1} parent=1 // pred_check
      _
    $region3: #{tpu_custom_call.1} parent=1 // pred_check_branch
      %22 = sbr.rel (0) target = $region5
    $region4: #{tpu_custom_call.1} parent=1 // pred_region
      %24 = vsyncadd [#allocation3], 0
      %s26 = sshll.u32 %s0, 4
      %s27 = int_to_ptr.hbm [resolvable:$true] %s26
      %s28 = sshll.u32 [#allocation2], 4
      %s29 = int_to_ptr.vmem [resolvable:$true] %s28
      %31 = dma.hbm_to_vmem [thread:$0]  %s27, 128, %s29, [#allocation3]
    $region5: #{tpu_custom_call.1} parent=1 // pred_fallthru
      _
    // Predicated region
    $region6: #{tpu_custom_call.1} parent=1 // pred_check
      _
    $region7: #{tpu_custom_call.1} parent=1 // pred_check_branch
      %33 = sbr.rel (0) target = $region9
    $region8: #{tpu_custom_call.1} parent=1 // pred_region
      %35 = vsyncadd [#allocation6], 0
      %s37 = sshll.u32 %s1, 4
      %s38 = int_to_ptr.hbm [resolvable:$true] %s37
      %s39 = sshll.u32 [#allocation5], 4
      %s40 = int_to_ptr.vmem [resolvable:$true] %s39
      %42 = dma.hbm_to_vmem [thread:$0]  %s38, 128, %s40, [#allocation6]
    $region9: #{tpu_custom_call.1} parent=1 // pred_fallthru
      _
    // Predicated region
    $region10: #{tpu_custom_call.1} parent=1 // pred_check
      _
    $region11: #{tpu_custom_call.1} parent=1 // pred_check_branch
      %44 = sbr.rel (0) target = $region13
    $region12: #{tpu_custom_call.1} parent=1 // pred_region
      %46 = vsyncadd [#allocation6], 0
      %s47 = sshll.u32 %s2, 4
      %s48 = int_to_ptr.hbm [resolvable:$true] %s47
      %s49 = sshll.u32 [#allocation7], 4
      %s50 = int_to_ptr.vmem [resolvable:$true] %s49
      %55 = dma.hbm_to_vmem [thread:$0]  %s48, 2048, %s50, [#allocation6], 128, 128, 8
    $region13: #{tpu_custom_call.1} parent=1 // pred_fallthru
      _
    // Predicated region
    $region14: #{tpu_custom_call.1} parent=1 // pred_check
      _
    $region15: #{tpu_custom_call.1} parent=1 // pred_check_branch
      %57 = sbr.rel (0) target = $region17
    $region16: #{tpu_custom_call.1} parent=1 // pred_region
      %59 = vsyncadd [#allocation9], 0
      %s60 = sshll.u32 %s3, 4
      %s61 = int_to_ptr.hbm [resolvable:$true] %s60
      %s62 = sshll.u32 [#allocation8], 4
      %s63 = int_to_ptr.vmem [resolvable:$true] %s62
      %68 = dma.hbm_to_vmem [thread:$0]  %s61, 2048, %s63, [#allocation9], 128, 128, 8
    $region17: #{tpu_custom_call.1} parent=1 // pred_fallthru
      _
    // Predicated region
    $region18: #{tpu_custom_call.1} parent=1 // pred_check
      _
    $region19: #{tpu_custom_call.1} parent=1 // pred_check_branch
      %70 = sbr.rel (0) target = $region21
    $region20: #{tpu_custom_call.1} parent=1 // pred_region
      _
    $region21: #{tpu_custom_call.1} parent=1 // pred_fallthru
      _
    // Predicated region
    $region22: #{tpu_custom_call.1} parent=1 // pred_check
      _
    $region23: #{tpu_custom_call.1} parent=1 // pred_check_branch
      %72 = sbr.rel (0) target = $region25
    $region24: #{tpu_custom_call.1} parent=1 // pred_region
      %74 = vsyncadd [#allocation9], 0
      %s75 = sshll.u32 %s5, 4
      %s76 = int_to_ptr.hbm [resolvable:$true] %s75
      %s77 = sshll.u32 [#allocation10], 4
      %s78 = int_to_ptr.vmem [resolvable:$true] %s77
      %83 = dma.hbm_to_vmem [thread:$0]  %s76, 2048, %s78, [#allocation9], 128, 128, 8
    $region25: #{tpu_custom_call.1} parent=1 // pred_fallthru
      _
    // Predicated region
    $region26: #{tpu_custom_call.1} parent=1 // pred_check
      _
    $region27: #{tpu_custom_call.1} parent=1 // pred_check_branch
      %85 = sbr.rel (0) target = $region29
    $region28: #{tpu_custom_call.1} parent=1 // pred_region
      _
    $region29: #{tpu_custom_call.1} parent=1 // pred_fallthru
      _
    // Predicated region
    $region30: #{tpu_custom_call.1} parent=1 // pred_check
      _
    $region31: #{tpu_custom_call.1} parent=1 // pred_check_branch
      %87 = sbr.rel (0) target = $region33
    $region32: #{tpu_custom_call.1} parent=1 // pred_region
      %89 = vsyncadd [#allocation12], 0
      %s90 = sshll.u32 %s7, 4
      %s91 = int_to_ptr.hbm [resolvable:$true] %s90
      %s92 = sshll.u32 [#allocation11], 4
      %s93 = int_to_ptr.vmem [resolvable:$true] %s92
      %98 = dma.hbm_to_vmem [thread:$0]  %s91, 2048, %s93, [#allocation12], 128, 128, 8
    $region33: #{tpu_custom_call.1} parent=1 // pred_fallthru
      _
    // Predicated region
    $region34: #{tpu_custom_call.1} parent=1 // pred_check
      _
    $region35: #{tpu_custom_call.1} parent=1 // pred_check_branch
      %100 = sbr.rel (0) target = $region37
    $region36: #{tpu_custom_call.1} parent=1 // pred_region
      _
    $region37: #{tpu_custom_call.1} parent=1 // pred_fallthru
      _
    // Predicated region
    $region38: #{tpu_custom_call.1} parent=1 // pred_check
      _
    $region39: #{tpu_custom_call.1} parent=1 // pred_check_branch
      %102 = sbr.rel (0) target = $region41
    $region40: #{tpu_custom_call.1} parent=1 // pred_region
      %104 = vsyncadd [#allocation12], 0
      %s105 = sshll.u32 %s9, 4
      %s106 = int_to_ptr.hbm [resolvable:$true] %s105
      %s107 = sshll.u32 [#allocation13], 4
      %s108 = int_to_ptr.vmem [resolvable:$true] %s107
      %113 = dma.hbm_to_vmem [thread:$0]  %s106, 4096, %s108, [#allocation12], 256, 256, 16
    $region41: #{tpu_custom_call.1} parent=1 // pred_fallthru
      _
    // Predicated region
    $region42: #{tpu_custom_call.1} parent=1 // pred_check
      _
    $region43: #{tpu_custom_call.1} parent=1 // pred_check_branch
      %115 = sbr.rel (0) target = $region45
    $region44: #{tpu_custom_call.1} parent=1 // pred_region
      _
    $region45: #{tpu_custom_call.1} parent=1 // pred_fallthru
      _
    // Predicated region
    $region46: #{tpu_custom_call.1} parent=1 // pred_check
      _
    $region47: #{tpu_custom_call.1} parent=1 // pred_check_branch
      %117 = sbr.rel (0) target = $region49
    $region48: #{tpu_custom_call.1} parent=1 // pred_region
      %119 = dma.done [#allocation3], 128
    $region49: #{tpu_custom_call.1} parent=1 // pred_fallthru
      _
    // Predicated region
    $region50: #{tpu_custom_call.1} parent=1 // pred_check
      _
    $region51: #{tpu_custom_call.1} parent=1 // pred_check_branch
      %121 = sbr.rel (0) target = $region53
    $region52: #{tpu_custom_call.1} parent=1 // pred_region
      %123 = dma.done [#allocation6], 128
    $region53: #{tpu_custom_call.1} parent=1 // pred_fallthru
      _
    // Predicated region
    $region54: #{tpu_custom_call.1} parent=1 // pred_check
      _
    $region55: #{tpu_custom_call.1} parent=1 // pred_check_branch
      %125 = sbr.rel (0) target = $region57
    $region56: #{tpu_custom_call.1} parent=1 // pred_region
      %127 = dma.done [#allocation6], 2048
    $region57: #{tpu_custom_call.1} parent=1 // pred_fallthru
      _
    // Predicated region
    $region58: #{tpu_custom_call.1} parent=1 // pred_check
      _
    $region59: #{tpu_custom_call.1} parent=1 // pred_check_branch
      %129 = sbr.rel (0) target = $region61
    $region60: #{tpu_custom_call.1} parent=1 // pred_region
      %131 = dma.done [#allocation9], 2048
    $region61: #{tpu_custom_call.1} parent=1 // pred_fallthru
      _
    // Predicated region
    $region62: #{tpu_custom_call.1} parent=1 // pred_check
      _
    $region63: #{tpu_custom_call.1} parent=1 // pred_check_branch
      %133 = sbr.rel (0) target = $region65
    $region64: #{tpu_custom_call.1} parent=1 // pred_region
      %135 = dma.done [#allocation9], 2048
    $region65: #{tpu_custom_call.1} parent=1 // pred_fallthru
      _
    // Predicated region
    $region66: #{tpu_custom_call.1} parent=1 // pred_check
      _
    $region67: #{tpu_custom_call.1} parent=1 // pred_check_branch
      %137 = sbr.rel (0) target = $region69
    $region68: #{tpu_custom_call.1} parent=1 // pred_region
      %139 = dma.done [#allocation12], 2048
    $region69: #{tpu_custom_call.1} parent=1 // pred_fallthru
      _
    // Predicated region
    $region70: #{tpu_custom_call.1} parent=1 // pred_check
      _
    $region71: #{tpu_custom_call.1} parent=1 // pred_check_branch
      %141 = sbr.rel (0) target = $region73
    $region72: #{tpu_custom_call.1} parent=1 // pred_region
      %143 = dma.done [#allocation12], 4096
    $region73: #{tpu_custom_call.1} parent=1 // pred_fallthru
      _
    %v144 = vld [vmem:[#allocation2] sm:$0xff]
    %v145 = vld [vmem:[#allocation7] sm:$0xff]
    %v146 = vld [vmem:[#allocation7 + $0x8] sm:$0xff]
    %v147 = vld [vmem:[#allocation7 + $0x10] sm:$0xff]
    %v148 = vld [vmem:[#allocation7 + $0x18] sm:$0xff]
    %v149 = vld [vmem:[#allocation7 + $0x20] sm:$0xff]
    %v150 = vld [vmem:[#allocation7 + $0x28] sm:$0xff]
    %v151 = vld [vmem:[#allocation7 + $0x30] sm:$0xff]
    %v152 = vld [vmem:[#allocation7 + $0x38] sm:$0xff]
    %v153 = vld [vmem:[#allocation7 + $0x40] sm:$0xff]
    %v154 = vld [vmem:[#allocation7 + $0x48] sm:$0xff]
    %v155 = vld [vmem:[#allocation7 + $0x50] sm:$0xff]
    %v156 = vld [vmem:[#allocation7 + $0x58] sm:$0xff]
    %v157 = vld [vmem:[#allocation7 + $0x60] sm:$0xff]
    %v158 = vld [vmem:[#allocation7 + $0x68] sm:$0xff]
    %v159 = vld [vmem:[#allocation7 + $0x70] sm:$0xff]
    %v160 = vld [vmem:[#allocation7 + $0x78] sm:$0xff]
    %v161 = vld [vmem:[#allocation5] sm:$0xff]
    %v162 = vld [vmem:[#allocation8] sm:$0xff]
    %v163 = vld [vmem:[#allocation8 + $0x8] sm:$0xff]
    %v164 = vld [vmem:[#allocation8 + $0x10] sm:$0xff]
    %v165 = vld [vmem:[#allocation8 + $0x18] sm:$0xff]
    %v166 = vld [vmem:[#allocation8 + $0x20] sm:$0xff]
    %v167 = vld [vmem:[#allocation8 + $0x28] sm:$0xff]
    %v168 = vld [vmem:[#allocation8 + $0x30] sm:$0xff]
    %v169 = vld [vmem:[#allocation8 + $0x38] sm:$0xff]
    %v170 = vld [vmem:[#allocation8 + $0x40] sm:$0xff]
    %v171 = vld [vmem:[#allocation8 + $0x48] sm:$0xff]
    %v172 = vld [vmem:[#allocation8 + $0x50] sm:$0xff]
    %v173 = vld [vmem:[#allocation8 + $0x58] sm:$0xff]
    %v174 = vld [vmem:[#allocation8 + $0x60] sm:$0xff]
    %v175 = vld [vmem:[#allocation8 + $0x68] sm:$0xff]
    %v176 = vld [vmem:[#allocation8 + $0x70] sm:$0xff]
    %v177 = vld [vmem:[#allocation8 + $0x78] sm:$0xff]
    %178 = vmatpush.msra.mxu0 %v177
    %179 = vmatpush.msra.mxu0 %v176
    %180 = vmatpush.msra.mxu0 %v175
    %181 = vmatpush.msra.mxu0 %v174
    %182 = vmatpush.msra.mxu0 %v173
    %183 = vmatpush.msra.mxu0 %v172
    %184 = vmatpush.msra.mxu0 %v171
    %185 = vmatpush.msra.mxu0 %v170
    %186 = vmatpush.msra.mxu0 %v169
    %187 = vmatpush.msra.mxu0 %v168
    %188 = vmatpush.msra.mxu0 %v167
    %189 = vmatpush.msra.mxu0 %v166
    %190 = vmatpush.msra.mxu0 %v165
    %191 = vmatpush.msra.mxu0 %v164
    %192 = vmatpush.msra.mxu0 %v163
    %193 = vmatpush.msra.mxu0 %v162
    %194 = vmatmul.f32.gmra.mxu0 %v161
    %v195 = vpop.f32.mrf.mxu0
    %v196 = vadd.f32 0.0, %v195
    %197 = vdwg.mxu0
    %198 = vmatpush.msra.mxu0 %v160
    %199 = vmatpush.msra.mxu0 %v159
    %200 = vmatpush.msra.mxu0 %v158
    %201 = vmatpush.msra.mxu0 %v157
    %202 = vmatpush.msra.mxu0 %v156
    %203 = vmatpush.msra.mxu0 %v155
    %204 = vmatpush.msra.mxu0 %v154
    %205 = vmatpush.msra.mxu0 %v153
    %206 = vmatpush.msra.mxu0 %v152
    %207 = vmatpush.msra.mxu0 %v151
    %208 = vmatpush.msra.mxu0 %v150
    %209 = vmatpush.msra.mxu0 %v149
    %210 = vmatpush.msra.mxu0 %v148
    %211 = vmatpush.msra.mxu0 %v147
    %212 = vmatpush.msra.mxu0 %v146
    %213 = vmatpush.msra.mxu0 %v145
    %214 = vmatmul.f32.gmra.mxu0 %v144
    %v215 = vpop.f32.mrf.mxu0
    %v216 = vadd.f32 %v196, %v215
    %217 = vdwg.mxu0
    %v218 = vld [vmem:[%s4] sm:$0x1]
    %v220 = vperm.slane %v218, 0
    %v222 = vadd.f32 %v216, %v220
    %v223 = vmax.f32 %v222, 0.0
    %v224 = vld [vmem:[#allocation10] sm:$0xff]
    %v225 = vld [vmem:[#allocation10 + $0x8] sm:$0xff]
    %v226 = vld [vmem:[#allocation10 + $0x10] sm:$0xff]
    %v227 = vld [vmem:[#allocation10 + $0x18] sm:$0xff]
    %v228 = vld [vmem:[#allocation10 + $0x20] sm:$0xff]
    %v229 = vld [vmem:[#allocation10 + $0x28] sm:$0xff]
    %v230 = vld [vmem:[#allocation10 + $0x30] sm:$0xff]
    %v231 = vld [vmem:[#allocation10 + $0x38] sm:$0xff]
    %v232 = vld [vmem:[#allocation10 + $0x40] sm:$0xff]
    %v233 = vld [vmem:[#allocation10 + $0x48] sm:$0xff]
    %v234 = vld [vmem:[#allocation10 + $0x50] sm:$0xff]
    %v235 = vld [vmem:[#allocation10 + $0x58] sm:$0xff]
    %v236 = vld [vmem:[#allocation10 + $0x60] sm:$0xff]
    %v237 = vld [vmem:[#allocation10 + $0x68] sm:$0xff]
    %v238 = vld [vmem:[#allocation10 + $0x70] sm:$0xff]
    %v239 = vld [vmem:[#allocation10 + $0x78] sm:$0xff]
    %v240 = vld [vmem:[%s6] sm:$0x1]
    %v242 = vperm.slane %v240, 0
    %244 = vmatpush.msra.mxu0 %v239
    %245 = vmatpush.msra.mxu0 %v238
    %246 = vmatpush.msra.mxu0 %v237
    %247 = vmatpush.msra.mxu0 %v236
    %248 = vmatpush.msra.mxu0 %v235
    %249 = vmatpush.msra.mxu0 %v234
    %250 = vmatpush.msra.mxu0 %v233
    %251 = vmatpush.msra.mxu0 %v232
    %252 = vmatpush.msra.mxu0 %v231
    %253 = vmatpush.msra.mxu0 %v230
    %254 = vmatpush.msra.mxu0 %v229
    %255 = vmatpush.msra.mxu0 %v228
    %256 = vmatpush.msra.mxu0 %v227
    %257 = vmatpush.msra.mxu0 %v226
    %258 = vmatpush.msra.mxu0 %v225
    %259 = vmatpush.msra.mxu0 %v224
    %260 = vmatmul.f32.gmra.mxu0 %v223
    %v261 = vpop.f32.mrf.mxu0
    %v262 = vadd.f32 %v242, %v261
    %263 = vdwg.mxu0
    %v264 = vmax.f32 %v262, 0.0
    %v265 = vld [vmem:[#allocation11] sm:$0xff]
    %v266 = vld [vmem:[#allocation11 + $0x8] sm:$0xff]
    %v267 = vld [vmem:[#allocation11 + $0x10] sm:$0xff]
    %v268 = vld [vmem:[#allocation11 + $0x18] sm:$0xff]
    %v269 = vld [vmem:[#allocation11 + $0x20] sm:$0xff]
    %v270 = vld [vmem:[#allocation11 + $0x28] sm:$0xff]
    %v271 = vld [vmem:[#allocation11 + $0x30] sm:$0xff]
    %v272 = vld [vmem:[#allocation11 + $0x38] sm:$0xff]
    %v273 = vld [vmem:[#allocation11 + $0x40] sm:$0xff]
    %v274 = vld [vmem:[#allocation11 + $0x48] sm:$0xff]
    %v275 = vld [vmem:[#allocation11 + $0x50] sm:$0xff]
    %v276 = vld [vmem:[#allocation11 + $0x58] sm:$0xff]
    %v277 = vld [vmem:[#allocation11 + $0x60] sm:$0xff]
    %v278 = vld [vmem:[#allocation11 + $0x68] sm:$0xff]
    %v279 = vld [vmem:[#allocation11 + $0x70] sm:$0xff]
    %v280 = vld [vmem:[#allocation11 + $0x78] sm:$0xff]
    %v281 = vld [vmem:[%s8] sm:$0x1]
    %v283 = vperm.slane %v281, 0
    %285 = vmatpush.msra.mxu0 %v280
    %286 = vmatpush.msra.mxu0 %v279
    %287 = vmatpush.msra.mxu0 %v278
    %288 = vmatpush.msra.mxu0 %v277
    %289 = vmatpush.msra.mxu0 %v276
    %290 = vmatpush.msra.mxu0 %v275
    %291 = vmatpush.msra.mxu0 %v274
    %292 = vmatpush.msra.mxu0 %v273
    %293 = vmatpush.msra.mxu0 %v272
    %294 = vmatpush.msra.mxu0 %v271
    %295 = vmatpush.msra.mxu0 %v270
    %296 = vmatpush.msra.mxu0 %v269
    %297 = vmatpush.msra.mxu0 %v268
    %298 = vmatpush.msra.mxu0 %v267
    %299 = vmatpush.msra.mxu0 %v266
    %300 = vmatpush.msra.mxu0 %v265
    %301 = vmatmul.f32.gmra.mxu0 %v264
    %v302 = vpop.f32.mrf.mxu0
    %v303 = vadd.f32 %v283, %v302
    %304 = vdwg.mxu0
    %v305 = vld [vmem:[#allocation13] sm:$0xff]
    %v306 = vld [vmem:[#allocation13 + $0x8] sm:$0xff]
    %v307 = vld [vmem:[#allocation13 + $0x10] sm:$0xff]
    %v308 = vld [vmem:[#allocation13 + $0x18] sm:$0xff]
    %v309 = vld [vmem:[#allocation13 + $0x20] sm:$0xff]
    %v310 = vld [vmem:[#allocation13 + $0x28] sm:$0xff]
    %v311 = vld [vmem:[#allocation13 + $0x30] sm:$0xff]
    %v312 = vld [vmem:[#allocation13 + $0x38] sm:$0xff]
    %v313 = vld [vmem:[#allocation13 + $0x40] sm:$0xff]
    %v314 = vld [vmem:[#allocation13 + $0x48] sm:$0xff]
    %v315 = vld [vmem:[#allocation13 + $0x50] sm:$0xff]
    %v316 = vld [vmem:[#allocation13 + $0x58] sm:$0xff]
    %v317 = vld [vmem:[#allocation13 + $0x60] sm:$0xff]
    %v318 = vld [vmem:[#allocation13 + $0x68] sm:$0xff]
    %v319 = vld [vmem:[#allocation13 + $0x70] sm:$0xff]
    %v320 = vld [vmem:[#allocation13 + $0x78] sm:$0xff]
    %v321 = vld [vmem:[#allocation13 + $0x80] sm:$0xff]
    %v322 = vld [vmem:[#allocation13 + $0x88] sm:$0xff]
    %v323 = vld [vmem:[#allocation13 + $0x90] sm:$0xff]
    %v324 = vld [vmem:[#allocation13 + $0x98] sm:$0xff]
    %v325 = vld [vmem:[#allocation13 + $0xa0] sm:$0xff]
    %v326 = vld [vmem:[#allocation13 + $0xa8] sm:$0xff]
    %v327 = vld [vmem:[#allocation13 + $0xb0] sm:$0xff]
    %v328 = vld [vmem:[#allocation13 + $0xb8] sm:$0xff]
    %v329 = vld [vmem:[#allocation13 + $0xc0] sm:$0xff]
    %v330 = vld [vmem:[#allocation13 + $0xc8] sm:$0xff]
    %v331 = vld [vmem:[#allocation13 + $0xd0] sm:$0xff]
    %v332 = vld [vmem:[#allocation13 + $0xd8] sm:$0xff]
    %v333 = vld [vmem:[#allocation13 + $0xe0] sm:$0xff]
    %v334 = vld [vmem:[#allocation13 + $0xe8] sm:$0xff]
    %v335 = vld [vmem:[#allocation13 + $0xf0] sm:$0xff]
    %v336 = vld [vmem:[#allocation13 + $0xf8] sm:$0xff]
    %v337 = vld [vmem:[%s10] sm:$0x3]
    %v339 = vperm.slane %v337, 0
    %v340 = vperm.slane %v337, 1
    %343 = vmatpush.msra.mxu0 %v335
    %344 = vmatpush.msra.mxu0 %v333
    %345 = vmatpush.msra.mxu0 %v331
    %346 = vmatpush.msra.mxu0 %v329
    %347 = vmatpush.msra.mxu0 %v327
    %348 = vmatpush.msra.mxu0 %v325
    %349 = vmatpush.msra.mxu0 %v323
    %350 = vmatpush.msra.mxu0 %v321
    %351 = vmatpush.msra.mxu0 %v319
    %352 = vmatpush.msra.mxu0 %v317
    %353 = vmatpush.msra.mxu0 %v315
    %354 = vmatpush.msra.mxu0 %v313
    %355 = vmatpush.msra.mxu0 %v311
    %356 = vmatpush.msra.mxu0 %v309
    %357 = vmatpush.msra.mxu0 %v307
    %358 = vmatpush.msra.mxu0 %v305
    %359 = vmatmul.f32.gmra.mxu0 %v303
    %v360 = vpop.f32.mrf.mxu0
    %v361 = vadd.f32 %v339, %v360
    %362 = vdwg.mxu0
    %363 = vmatpush.msra.mxu0 %v336
    %364 = vmatpush.msra.mxu0 %v334
    %365 = vmatpush.msra.mxu0 %v332
    %366 = vmatpush.msra.mxu0 %v330
    %367 = vmatpush.msra.mxu0 %v328
    %368 = vmatpush.msra.mxu0 %v326
    %369 = vmatpush.msra.mxu0 %v324
    %370 = vmatpush.msra.mxu0 %v322
    %371 = vmatpush.msra.mxu0 %v320
    %372 = vmatpush.msra.mxu0 %v318
    %373 = vmatpush.msra.mxu0 %v316
    %374 = vmatpush.msra.mxu0 %v314
    %375 = vmatpush.msra.mxu0 %v312
    %376 = vmatpush.msra.mxu0 %v310
    %377 = vmatpush.msra.mxu0 %v308
    %378 = vmatpush.msra.mxu0 %v306
    %379 = vmatmul.f32.gmra.mxu0 %v303
    %v380 = vpop.f32.mrf.mxu0
    %v381 = vadd.f32 %v340, %v380
    %382 = vdwg.mxu0
    %v383 = vxor.u32 %v361, 2147483648
    %v384 = vxor.u32 %v381, 2147483648
    %v385 = vmul.f32 %v383, 1.442695
    %v386 = vpow.pop %v385
    %v387 = vmul.f32 %v384, 1.442695
    %v388 = vpow.pop %v387
    %v389 = vadd.f32 %v386, 1.0
    %v390 = vadd.f32 %v388, 1.0
    %v391 = vrcp.pop %v389
    %v392 = vmul.f32 %v389, %v391
    %v393 = vsub.f32 1.0, %v392
    %v394 = vmul.f32 %v391, %v393
    %v395 = vadd.f32 %v391, %v394
    %vm396 = vweird.f32 %v389
    %vm397 = vweird.f32 %v391
    %vm398 = vmor %vm396, %vm397
    %v399 = vsel %vm398, %v391, %v395
    %v400 = vand.u32 2147483647, %v389
    %vm401 = vcmp.eq.f32.partialorder %v400, 8.507059e+37
    %v402 = vand.u32 %v389, 2147483648
    %v403 = vor.u32 1.1754944e-38, %v402
    %v404 = vsel %vm401, %v403, %v399
    %v405 = vmul.f32 1.0, %v404
    %v406 = vrcp.pop %v390
    %v407 = vmul.f32 %v390, %v406
    %v408 = vsub.f32 1.0, %v407
    %v409 = vmul.f32 %v406, %v408
    %v410 = vadd.f32 %v406, %v409
    %vm411 = vweird.f32 %v390
    %vm412 = vweird.f32 %v406
    %vm413 = vmor %vm411, %vm412
    %v414 = vsel %vm413, %v406, %v410
    %v415 = vand.u32 2147483647, %v390
    %vm416 = vcmp.eq.f32.partialorder %v415, 8.507059e+37
    %v417 = vand.u32 %v390, 2147483648
    %v418 = vor.u32 1.1754944e-38, %v417
    %v419 = vsel %vm416, %v418, %v414
    %v420 = vmul.f32 1.0, %v419
    %v421 = vadd.f32 %v405, 0.0
    %422 = vst [vmem:[#allocation14] sm:$0xff] %v421
    %v423 = vmul.f32 %v420, 4.0
    %v424 = vadd.f32 %v423, -3.0
    %425 = vst [vmem:[#allocation14 + $0x8] sm:$0xff] %v424
    // Predicated region
    $region74: #{tpu_custom_call.1} parent=1 // pred_check
      _
    $region75: #{tpu_custom_call.1} parent=1 // pred_check_branch
      %427 = sbr.rel (0) target = $region77
    $region76: #{tpu_custom_call.1} parent=1 // pred_region
      %429 = vsyncadd [#allocation4], 0
      %s431 = sshll.u32 [#allocation14], 4
      %s432 = int_to_ptr.vmem [resolvable:$true] %s431
      %s433 = sshll.u32 %s11, 4
      %s434 = int_to_ptr.hbm [resolvable:$true] %s433
      %436 = dma.vmem_to_hbm [thread:$0]  %s432, 256, %s434, [#allocation4]
    $region77: #{tpu_custom_call.1} parent=1 // pred_fallthru
      _
    // Predicated region
    $region78: #{tpu_custom_call.1} parent=1 // pred_check
      _
    $region79: #{tpu_custom_call.1} parent=1 // pred_check_branch
      %438 = sbr.rel (0) target = $region81
    $region80: #{tpu_custom_call.1} parent=1 // pred_region
      %440 = dma.done [#allocation4], 256
    $region81: #{tpu_custom_call.1} parent=1 // pred_fallthru
      _
    %441 = vsyncpa [#allocation3], 1
    %442 = vsyncpa [#allocation6], 1
    %443 = vsyncpa [#allocation9], 1
    %444 = vsyncpa [#allocation12], 1
    %445 = vsyncpa [#allocation4], 1

</llo_original>
